<compile_context>
chip_gen: v7x
topology: tpu7x:2x2x1
jax: 0.10.0
libtpu: 0.0.40
codegen_flags: <defaults>
</compile_context>

<pallas_src>
import jax
import jax.numpy as jnp
from jax.experimental import pallas as pl
from jax.experimental.pallas import tpu as pltpu

_LANE = 128
_SUBLANE = 8


def _round_up(x, m):
    return ((x + m - 1) // m) * m


def _make_mlp_kernel(num_hidden_linear, with_hidden_out):
    """Fused MLP kernel for a fixed (static) number of hidden Linear layers.

    Weights arrive already transposed as (in, out), bf16, zero-padded to 128
    lanes on the output-feature axis; biases as (1, out_padded) in f32.
    """

    def kernel(*refs):
        x_ref = refs[0]
        w_in_ref, b_in_ref = refs[1], refs[2]
        hidden_refs = refs[3:3 + 2 * num_hidden_linear]
        w_out_ref = refs[3 + 2 * num_hidden_linear]
        b_out_ref = refs[4 + 2 * num_hidden_linear]
        if with_hidden_out:
            y_ref, h_ref = refs[-2], refs[-1]
        else:
            y_ref = refs[-1]

        x = x_ref[...]  # (tile_b, D_in) bf16

        # dropout[0] -> identity (eval mode); h = relu(x @ W_in + b_in)
        h = jnp.dot(x, w_in_ref[...], preferred_element_type=jnp.float32)
        h = jnp.maximum(h + b_in_ref[...], 0.0)

        # hidden layers: dropout (identity) + relu(h @ W_h + b_h)
        for i in range(num_hidden_linear):
            w = hidden_refs[2 * i][...]
            b = hidden_refs[2 * i + 1][...]
            h = jnp.dot(h.astype(w.dtype), w, preferred_element_type=jnp.float32)
            h = jnp.maximum(h + b, 0.0)

        if with_hidden_out:
            h_ref[...] = h.astype(h_ref.dtype)

        # final dropout (identity), then output_fc (no activation)
        w_out = w_out_ref[...]
        y = jnp.dot(h.astype(w_out.dtype), w_out,
                    preferred_element_type=jnp.float32)
        y_ref[...] = (y + b_out_ref[...]).astype(y_ref.dtype)

    return kernel


def mlp_forward(x, params, *, num_hidden_layers, return_hidden=True, tile_b=512):
    """Runs the fused MLP Pallas kernel.

    x: (batch, ...) -- flattened to (batch, input_dim) like x.view(batch, -1).
    params: PyTorch-Linear-style dict: w_in (N, D), b_in (1, N),
            hidden [(N, N), (1, N)] * (num_hidden_layers - 1),
            w_out (O, N), b_out (1, O).
    Returns (y_pred, h_hidden) if return_hidden else y_pred.
    """
    assert num_hidden_layers >= 1
    batch = x.shape[0]
    x2d = x.reshape(batch, -1)
    input_dim = x2d.shape[1]

    num_hidden_linear = num_hidden_layers - 1
    n_neurons = params["w_in"].shape[0]      # PyTorch layout: (out, in)
    output_dim = params["w_out"].shape[0]
    assert params["w_in"].shape[1] == input_dim
    assert len(params["hidden"]) == num_hidden_linear

    # Lane-dense padded feature dims.
    n_pad = _round_up(n_neurons, _LANE)
    o_pad = _round_up(output_dim, _LANE)

    compute_dtype = jnp.bfloat16

    def prep_w(w, in_pad, out_pad):
        # (out, in) -> (in, out), bf16, zero-padded.
        wt = jnp.asarray(w).T.astype(compute_dtype)
        return jnp.pad(wt, ((0, in_pad - wt.shape[0]), (0, out_pad - wt.shape[1])))

    def prep_b(b, out_pad):
        b2 = jnp.asarray(b).reshape(1, -1).astype(jnp.float32)
        return jnp.pad(b2, ((0, 0), (0, out_pad - b2.shape[1])))

    w_in = prep_w(params["w_in"], input_dim, n_pad)
    b_in = prep_b(params["b_in"], n_pad)
    hidden = [(prep_w(w, n_pad, n_pad), prep_b(b, n_pad))
              for (w, b) in params["hidden"]]
    w_out = prep_w(params["w_out"], n_pad, o_pad)
    b_out = prep_b(params["b_out"], o_pad)

    # ---- batch tile selection -------------------------------------------
    # Tile must be a multiple of 8 (sublanes). Clamp so the double-buffered
    # per-tile streams (x bf16, y f32, optional h f32) plus resident weights
    # stay well inside the default scoped VMEM budget (leave ~16 MiB).
    weight_bytes = (w_in.size + w_out.size
                    + sum(w.size for w, _ in hidden)) * 2 \
        + (b_in.size + b_out.size + sum(b.size for _, b in hidden)) * 4
    per_row_bytes = 2 * (input_dim * 2                      # x (bf16)
                         + o_pad * 4                        # y (f32)
                         + (n_pad * 4 if return_hidden else 0))  # h (f32)
    vmem_budget = 16 * 1024 * 1024
    max_tile = max(_SUBLANE,
                   (max(vmem_budget - weight_bytes, per_row_bytes * _SUBLANE)
                    // per_row_bytes) // _SUBLANE * _SUBLANE)
    tile = max(_SUBLANE, min(_round_up(tile_b, _SUBLANE),
                             _round_up(batch, _SUBLANE),
                             max_tile))
    padded_batch = _round_up(batch, tile)
    grid = (padded_batch // tile,)

    x2d = x2d.astype(compute_dtype)
    if padded_batch != batch:
        x2d = jnp.pad(x2d, ((0, padded_batch - batch), (0, 0)))

    inputs = [x2d, w_in, b_in]
    for (w_h, b_h) in hidden:
        inputs.extend([w_h, b_h])
    inputs.extend([w_out, b_out])

    # x streams over the batch grid; weights/biases use a constant index_map
    # so they are fetched once and stay resident in VMEM across tiles.
    x_spec = pl.BlockSpec((tile, input_dim), lambda i: (i, 0))

    def const_spec(arr):
        return pl.BlockSpec(arr.shape, lambda i: (0, 0))

    in_specs = [x_spec] + [const_spec(a) for a in inputs[1:]]

    if return_hidden:
        out_shape = (jax.ShapeDtypeStruct((padded_batch, o_pad), jnp.float32),
                     jax.ShapeDtypeStruct((padded_batch, n_pad), jnp.float32))
        out_specs = (pl.BlockSpec((tile, o_pad), lambda i: (i, 0)),
                     pl.BlockSpec((tile, n_pad), lambda i: (i, 0)))
    else:
        out_shape = jax.ShapeDtypeStruct((padded_batch, o_pad), jnp.float32)
        out_specs = pl.BlockSpec((tile, o_pad), lambda i: (i, 0))

    kernel = _make_mlp_kernel(num_hidden_linear, return_hidden)
    result = pl.pallas_call(
        kernel,
        grid=grid,
        in_specs=in_specs,
        out_specs=out_specs,
        out_shape=out_shape,
        compiler_params=pltpu.CompilerParams(
            dimension_semantics=("parallel",)),  # megacore shard on v7x
    )(*inputs)

    if return_hidden:
        y_pad, h_pad = result
        return y_pad[:batch, :output_dim], h_pad[:batch, :n_neurons]
    else:
        return result[:batch, :output_dim]


def init_params(key, input_dim, output_dim, neurons_per_layer, num_hidden_layers):
    """Deterministic PyTorch-Linear-style init (uniform in +/- 1/sqrt(fan_in))."""
    params = {}
    keys = jax.random.split(key, 2 * (num_hidden_layers + 1))
    k_iter = iter(keys)

    def linear_init(k_w, k_b, fan_in, fan_out):
        bound = 1.0 / jnp.sqrt(fan_in)
        w = jax.random.uniform(k_w, (fan_out, fan_in), jnp.float32, -bound, bound)
        b = jax.random.uniform(k_b, (1, fan_out), jnp.float32, -bound, bound)
        return w, b

    params["w_in"], params["b_in"] = linear_init(next(k_iter), next(k_iter),
                                                 input_dim, neurons_per_layer)
    params["hidden"] = []
    for _ in range(num_hidden_layers - 1):
        w, b = linear_init(next(k_iter), next(k_iter),
                           neurons_per_layer, neurons_per_layer)
        params["hidden"].append((w, b))
    params["w_out"], params["b_out"] = linear_init(next(k_iter), next(k_iter),
                                                   neurons_per_layer, output_dim)
    return params


if __name__ == "__main__":
    # Small, MLP-consistent shapes.
    batch = 8
    input_dim = 32          # forward flattens x.view(batch, -1) -> (8, 32)
    neurons_per_layer = 64
    num_hidden_layers = 2   # -> 1 hidden Linear(64, 64)
    output_dim = 8

    key = jax.random.PRNGKey(0)
    k_x, k_p = jax.random.split(key)

    # Input given as (batch, 2, 16) to exercise the view/flatten path.
    x = jax.random.normal(k_x, (batch, 2, 16), jnp.float32)
    params = init_params(k_p, input_dim, output_dim, neurons_per_layer,
                         num_hidden_layers)

    y_pred, h_hidden = mlp_forward(x, params, num_hidden_layers=num_hidden_layers)
    jax.block_until_ready((y_pred, h_hidden))

    # Variant without the h_hidden writeback (half the output HBM traffic).
    y_only = mlp_forward(x, params, num_hidden_layers=num_hidden_layers,
                         return_hidden=False)
    jax.block_until_ready(y_only)

    # Pure-JAX f32 reference check (kernel uses bf16 inputs / f32 accumulate,
    # so tolerance is loosened accordingly).
    x2d = x.reshape(batch, -1)
    h_ref = jnp.maximum(x2d @ params["w_in"].T + params["b_in"], 0.0)
    for (w_h, b_h) in params["hidden"]:
        h_ref = jnp.maximum(h_ref @ w_h.T + b_h, 0.0)
    y_ref = h_ref @ params["w_out"].T + params["b_out"]

    assert y_pred.shape == (batch, output_dim)
    assert h_hidden.shape == (batch, neurons_per_layer)
    assert y_only.shape == (batch, output_dim)
    assert jnp.allclose(y_pred, y_ref, atol=2e-2, rtol=2e-2)
    assert jnp.allclose(h_hidden, h_ref, atol=2e-2, rtol=2e-2)
    assert jnp.allclose(y_only, y_pred, atol=1e-6, rtol=1e-6)

    print("KERNEL_OK")
</pallas_src>

<mosaic_0001>
module attributes {stable_mosaic.version = 11 : i64} {
  func.func @kernel(%arg0: i32, %arg1: memref<8x32xbf16, #tpu.memory_space<vmem>>, %arg2: memref<32x128xbf16, #tpu.memory_space<vmem>>, %arg3: memref<1x128xf32, #tpu.memory_space<vmem>>, %arg4: memref<128x128xbf16, #tpu.memory_space<vmem>>, %arg5: memref<1x128xf32, #tpu.memory_space<vmem>>, %arg6: memref<128x128xbf16, #tpu.memory_space<vmem>>, %arg7: memref<1x128xf32, #tpu.memory_space<vmem>>, %arg8: memref<8x128xf32, #tpu.memory_space<vmem>>, %arg9: memref<8x128xf32, #tpu.memory_space<vmem>>) attributes {dimension_semantics = [#tpu.dimension_semantics<parallel>], iteration_bounds = array<i64: 1>, scalar_prefetch = 0 : i64, scratch_operands = 0 : i64, tpu.core_type = #tpu.core_type<tc>, window_params = [{transform_indices = @transform_0, window_bounds = array<i64: 8, 32>}, {pipeline_mode = #tpu.pipeline_mode<synchronous>, transform_indices = @transform_1, window_bounds = array<i64: 32, 128>}, {pipeline_mode = #tpu.pipeline_mode<synchronous>, transform_indices = @transform_2, window_bounds = array<i64: 1, 128>}, {pipeline_mode = #tpu.pipeline_mode<synchronous>, transform_indices = @transform_3, window_bounds = array<i64: 128, 128>}, {pipeline_mode = #tpu.pipeline_mode<synchronous>, transform_indices = @transform_4, window_bounds = array<i64: 1, 128>}, {pipeline_mode = #tpu.pipeline_mode<synchronous>, transform_indices = @transform_5, window_bounds = array<i64: 128, 128>}, {pipeline_mode = #tpu.pipeline_mode<synchronous>, transform_indices = @transform_6, window_bounds = array<i64: 1, 128>}, {transform_indices = @transform_7, window_bounds = array<i64: 8, 128>}, {transform_indices = @transform_8, window_bounds = array<i64: 8, 128>}]} {
    %c0 = arith.constant 0 : index
    %c0_0 = arith.constant 0 : index
    %0 = vector.load %arg1[%c0, %c0_0] : memref<8x32xbf16, #tpu.memory_space<vmem>>, vector<8x32xbf16>
    %c0_1 = arith.constant 0 : index
    %c0_2 = arith.constant 0 : index
    %1 = vector.load %arg2[%c0_1, %c0_2] : memref<32x128xbf16, #tpu.memory_space<vmem>>, vector<32x128xbf16>
    %cst = arith.constant dense<0.000000e+00> : vector<8x128xf32>
    %2 = tpu.matmul %0, %1, %cst {dimension_numbers = #tpu.dot_dimension_numbers<[1], [0], [0], [1], [0, 0, 1, 1], [], []>} : vector<8x32xbf16>, vector<32x128xbf16>, vector<8x128xf32> -> vector<8x128xf32>
    %c0_3 = arith.constant 0 : index
    %c0_4 = arith.constant 0 : index
    %3 = vector.load %arg3[%c0_3, %c0_4] : memref<1x128xf32, #tpu.memory_space<vmem>>, vector<1x128xf32>
    %4 = vector.broadcast %3 : vector<1x128xf32> to vector<8x128xf32>
    %5 = arith.addf %2, %4 : vector<8x128xf32>
    %cst_5 = arith.constant 0.000000e+00 : f32
    %6 = vector.broadcast %cst_5 : f32 to vector<8x128xf32>
    %7 = arith.maximumf %5, %6 : vector<8x128xf32>
    %c0_6 = arith.constant 0 : index
    %c0_7 = arith.constant 0 : index
    %8 = vector.load %arg4[%c0_6, %c0_7] : memref<128x128xbf16, #tpu.memory_space<vmem>>, vector<128x128xbf16>
    %c0_8 = arith.constant 0 : index
    %c0_9 = arith.constant 0 : index
    %9 = vector.load %arg5[%c0_8, %c0_9] : memref<1x128xf32, #tpu.memory_space<vmem>>, vector<1x128xf32>
    %10 = arith.truncf %7 : vector<8x128xf32> to vector<8x128xbf16>
    %cst_10 = arith.constant dense<0.000000e+00> : vector<8x128xf32>
    %11 = tpu.matmul %10, %8, %cst_10 {dimension_numbers = #tpu.dot_dimension_numbers<[1], [0], [0], [1], [0, 0, 1, 1], [], []>} : vector<8x128xbf16>, vector<128x128xbf16>, vector<8x128xf32> -> vector<8x128xf32>
    %12 = vector.broadcast %9 : vector<1x128xf32> to vector<8x128xf32>
    %13 = arith.addf %11, %12 : vector<8x128xf32>
    %cst_11 = arith.constant 0.000000e+00 : f32
    %14 = vector.broadcast %cst_11 : f32 to vector<8x128xf32>
    %15 = arith.maximumf %13, %14 : vector<8x128xf32>
    %c0_12 = arith.constant 0 : index
    %c0_13 = arith.constant 0 : index
    %16 = vector.load %arg9[%c0_12, %c0_13] : memref<8x128xf32, #tpu.memory_space<vmem>>, vector<8x128xf32>
    tpu.vector_store %arg9[%c0_12, %c0_13], %15 {strides = array<i32>} : memref<8x128xf32, #tpu.memory_space<vmem>>, vector<8x128xf32>,
    %c0_14 = arith.constant 0 : index
    %c0_15 = arith.constant 0 : index
    %17 = vector.load %arg6[%c0_14, %c0_15] : memref<128x128xbf16, #tpu.memory_space<vmem>>, vector<128x128xbf16>
    %18 = arith.truncf %15 : vector<8x128xf32> to vector<8x128xbf16>
    %cst_16 = arith.constant dense<0.000000e+00> : vector<8x128xf32>
    %19 = tpu.matmul %18, %17, %cst_16 {dimension_numbers = #tpu.dot_dimension_numbers<[1], [0], [0], [1], [0, 0, 1, 1], [], []>} : vector<8x128xbf16>, vector<128x128xbf16>, vector<8x128xf32> -> vector<8x128xf32>
    %c0_17 = arith.constant 0 : index
    %c0_18 = arith.constant 0 : index
    %20 = vector.load %arg7[%c0_17, %c0_18] : memref<1x128xf32, #tpu.memory_space<vmem>>, vector<1x128xf32>
    %21 = vector.broadcast %20 : vector<1x128xf32> to vector<8x128xf32>
    %22 = arith.addf %19, %21 : vector<8x128xf32>
    %c0_19 = arith.constant 0 : index
    %c0_20 = arith.constant 0 : index
    %23 = vector.load %arg8[%c0_19, %c0_20] : memref<8x128xf32, #tpu.memory_space<vmem>>, vector<8x128xf32>
    tpu.vector_store %arg8[%c0_19, %c0_20], %22 {strides = array<i32>} : memref<8x128xf32, #tpu.memory_space<vmem>>, vector<8x128xf32>,
    return
  }
  func.func @transform_0(%arg0: i32) -> (i32, i32) {
    %c0_i32 = arith.constant 0 : i32
    %c0_i32_0 = arith.constant 0 : i32
    return %arg0, %c0_i32 : i32, i32
  }
  func.func @transform_1(%arg0: i32) -> (i32, i32) {
    %c0_i32 = arith.constant 0 : i32
    %c0_i32_0 = arith.constant 0 : i32
    %c0_i32_1 = arith.constant 0 : i32
    return %c0_i32, %c0_i32_0 : i32, i32
  }
  func.func @transform_2(%arg0: i32) -> (i32, i32) {
    %c0_i32 = arith.constant 0 : i32
    %c0_i32_0 = arith.constant 0 : i32
    %c0_i32_1 = arith.constant 0 : i32
    return %c0_i32, %c0_i32_0 : i32, i32
  }
  func.func @transform_3(%arg0: i32) -> (i32, i32) {
    %c0_i32 = arith.constant 0 : i32
    %c0_i32_0 = arith.constant 0 : i32
    %c0_i32_1 = arith.constant 0 : i32
    return %c0_i32, %c0_i32_0 : i32, i32
  }
  func.func @transform_4(%arg0: i32) -> (i32, i32) {
    %c0_i32 = arith.constant 0 : i32
    %c0_i32_0 = arith.constant 0 : i32
    %c0_i32_1 = arith.constant 0 : i32
    return %c0_i32, %c0_i32_0 : i32, i32
  }
  func.func @transform_5(%arg0: i32) -> (i32, i32) {
    %c0_i32 = arith.constant 0 : i32
    %c0_i32_0 = arith.constant 0 : i32
    %c0_i32_1 = arith.constant 0 : i32
    return %c0_i32, %c0_i32_0 : i32, i32
  }
  func.func @transform_6(%arg0: i32) -> (i32, i32) {
    %c0_i32 = arith.constant 0 : i32
    %c0_i32_0 = arith.constant 0 : i32
    %c0_i32_1 = arith.constant 0 : i32
    return %c0_i32, %c0_i32_0 : i32, i32
  }
  func.func @transform_7(%arg0: i32) -> (i32, i32) {
    %c0_i32 = arith.constant 0 : i32
    %c0_i32_0 = arith.constant 0 : i32
    return %arg0, %c0_i32 : i32, i32
  }
  func.func @transform_8(%arg0: i32) -> (i32, i32) {
    %c0_i32 = arith.constant 0 : i32
    %c0_i32_0 = arith.constant 0 : i32
    return %arg0, %c0_i32 : i32, i32
  }
}

</mosaic_0001>

<llo_original>
// kernel: tpu_custom_call.1
$region0: #{tpu_custom_call.1}
  #allocation0 [shape = 'u32[]', space=smem, size = 0x4, offset = 0x4, fixed_abs, tag = 'smem constant byte address 0x4 - core index']
  #allocation1 [shape = 'u32[144,128]{1,0:T(1,128)}', space=vmem, size = 0x12000, scoped, tag = 'internal scratch']
  %s0 = inlined_call_operand.hbm [shape: bf16[8,32], index: 0, kind: input, shape index: {}]
  %s1 = inlined_call_operand.hbm [shape: bf16[32,128], index: 1, kind: input, shape index: {}]
  %s2 = inlined_call_operand.vmem [shape: f32[1,128], index: 2, kind: input, shape index: {}]
  %s3 = inlined_call_operand.hbm [shape: bf16[128,128], index: 3, kind: input, shape index: {}]
  %s4 = inlined_call_operand.vmem [shape: f32[1,128], index: 4, kind: input, shape index: {}]
  %s5 = inlined_call_operand.hbm [shape: bf16[128,128], index: 5, kind: input, shape index: {}]
  %s6 = inlined_call_operand.vmem [shape: f32[1,128], index: 6, kind: input, shape index: {}]
  %s7 = inlined_call_operand.hbm [shape: f32[8,128], index: 7, kind: output, shape index: {0}]
  %s8 = inlined_call_operand.hbm [shape: f32[8,128], index: 8, kind: output, shape index: {1}]
  %9 = xla_tuple %s7, %s8
  %s10 = sld [smem:[#allocation0]]
  $region62: #{tpu_custom_call.1} parent=0
    _
  %s12 = ssub.s32 1, %s10
  %s13 = scalar_select 0, %s12, %s10
  $region1: #{tpu_custom_call.1} parent=0
    #allocation2 [shape = 'u8[2048]{0}', space=vmem, size = 0x800, scoped, tag = 'input window, operand 0, single buffered']
    #allocation3 [shape = 's32[1]{0}', space=sflag, size = 0x4, scoped, tag = 'scoped memory for tpu_custom_call.1']
    #allocation4 [shape = 's32[1]{0}', space=sflag, size = 0x4, scoped, tag = 'scoped memory for tpu_custom_call.1']
    #allocation5 [shape = 'u8[8192]{0}', space=vmem, size = 0x2000, scoped, tag = 'input window, operand 1, single buffered']
    #allocation6 [shape = 's32[1]{0}', space=sflag, size = 0x4, scoped, tag = 'scoped memory for tpu_custom_call.1']
    #allocation7 [shape = 'u8[32768]{0}', space=vmem, size = 0x8000, scoped, tag = 'input window, operand 3, single buffered']
    #allocation8 [shape = 'u8[32768]{0}', space=vmem, size = 0x8000, scoped, tag = 'input window, operand 5, single buffered']
    #allocation9 [shape = 's32[1]{0}', space=sflag, size = 0x4, scoped, tag = 'scoped memory for tpu_custom_call.1']
    #allocation10 [shape = 'u8[4096]{0}', space=vmem, size = 0x1000, scoped, tag = 'output window, operand 0, single buffered']
    #allocation11 [shape = 'u8[4096]{0}', space=vmem, size = 0x1000, scoped, tag = 'output window, operand 1, single buffered']
    #allocation12 [shape = 's32[1]{0}', space=sflag, size = 0x4, scoped, tag = 'scoped memory for tpu_custom_call.1']
    %14 = vsyncpa [#allocation3], 0
    %15 = vsyncpa [#allocation6], 0
    %16 = vsyncpa [#allocation9], 0
    %17 = vsyncpa [#allocation4], 0
    %18 = vsyncpa [#allocation12], 0
    // Predicated region
    $region2: #{tpu_custom_call.1} parent=1 // pred_check
      _
    $region3: #{tpu_custom_call.1} parent=1 // pred_check_branch
      %20 = sbr.rel (0) target = $region5
    $region4: #{tpu_custom_call.1} parent=1 // pred_region
      %s22 = ssub.s32 64, 64
      %23 = vsyncadd [#allocation3], %s22
      %s25 = sshll.u32 [#allocation2], 4
      %s26 = int_to_ptr.vmem [resolvable:$true] %s25
      %28 = dma.hbm_to_vmem [thread:$0]  %s0, 64, %s26, [#allocation3]
    $region5: #{tpu_custom_call.1} parent=1 // pred_fallthru
      _
    // Predicated region
    $region6: #{tpu_custom_call.1} parent=1 // pred_check
      _
    $region7: #{tpu_custom_call.1} parent=1 // pred_check_branch
      %30 = sbr.rel (0) target = $region9
    $region8: #{tpu_custom_call.1} parent=1 // pred_region
      %s32 = ssub.s32 256, 256
      %33 = vsyncadd [#allocation6], %s32
      %s34 = sshll.u32 [#allocation5], 4
      %s35 = int_to_ptr.vmem [resolvable:$true] %s34
      %40 = dma.hbm_to_vmem [thread:$0]  %s1, 256, %s35, [#allocation6], 64, 64, 4
    $region9: #{tpu_custom_call.1} parent=1 // pred_fallthru
      _
    // Predicated region
    $region10: #{tpu_custom_call.1} parent=1 // pred_check
      _
    $region11: #{tpu_custom_call.1} parent=1 // pred_check_branch
      %42 = sbr.rel (0) target = $region13
    $region12: #{tpu_custom_call.1} parent=1 // pred_region
      _
    $region13: #{tpu_custom_call.1} parent=1 // pred_fallthru
      _
    // Predicated region
    $region14: #{tpu_custom_call.1} parent=1 // pred_check
      _
    $region15: #{tpu_custom_call.1} parent=1 // pred_check_branch
      %44 = sbr.rel (0) target = $region17
    $region16: #{tpu_custom_call.1} parent=1 // pred_region
      %s46 = ssub.s32 1024, 1024
      %47 = vsyncadd [#allocation6], %s46
      %s48 = sshll.u32 [#allocation7], 4
      %s49 = int_to_ptr.vmem [resolvable:$true] %s48
      %54 = dma.hbm_to_vmem [thread:$0]  %s3, 1024, %s49, [#allocation6], 64, 64, 4
    $region17: #{tpu_custom_call.1} parent=1 // pred_fallthru
      _
    // Predicated region
    $region18: #{tpu_custom_call.1} parent=1 // pred_check
      _
    $region19: #{tpu_custom_call.1} parent=1 // pred_check_branch
      %56 = sbr.rel (0) target = $region21
    $region20: #{tpu_custom_call.1} parent=1 // pred_region
      _
    $region21: #{tpu_custom_call.1} parent=1 // pred_fallthru
      _
    // Predicated region
    $region22: #{tpu_custom_call.1} parent=1 // pred_check
      _
    $region23: #{tpu_custom_call.1} parent=1 // pred_check_branch
      %58 = sbr.rel (0) target = $region25
    $region24: #{tpu_custom_call.1} parent=1 // pred_region
      %s60 = ssub.s32 1024, 1024
      %61 = vsyncadd [#allocation9], %s60
      %s62 = sshll.u32 [#allocation8], 4
      %s63 = int_to_ptr.vmem [resolvable:$true] %s62
      %68 = dma.hbm_to_vmem [thread:$0]  %s5, 1024, %s63, [#allocation9], 64, 64, 4
    $region25: #{tpu_custom_call.1} parent=1 // pred_fallthru
      _
    // Predicated region
    $region26: #{tpu_custom_call.1} parent=1 // pred_check
      _
    $region27: #{tpu_custom_call.1} parent=1 // pred_check_branch
      %70 = sbr.rel (0) target = $region29
    $region28: #{tpu_custom_call.1} parent=1 // pred_region
      _
    $region29: #{tpu_custom_call.1} parent=1 // pred_fallthru
      _
    // Predicated region
    $region30: #{tpu_custom_call.1} parent=1 // pred_check
      _
    $region31: #{tpu_custom_call.1} parent=1 // pred_check_branch
      %72 = sbr.rel (0) target = $region33
    $region32: #{tpu_custom_call.1} parent=1 // pred_region
      %73 = dma.done [#allocation3], 64
    $region33: #{tpu_custom_call.1} parent=1 // pred_fallthru
      _
    // Predicated region
    $region34: #{tpu_custom_call.1} parent=1 // pred_check
      _
    $region35: #{tpu_custom_call.1} parent=1 // pred_check_branch
      %75 = sbr.rel (0) target = $region37
    $region36: #{tpu_custom_call.1} parent=1 // pred_region
      %76 = dma.done [#allocation6], 256
    $region37: #{tpu_custom_call.1} parent=1 // pred_fallthru
      _
    // Predicated region
    $region38: #{tpu_custom_call.1} parent=1 // pred_check
      _
    $region39: #{tpu_custom_call.1} parent=1 // pred_check_branch
      %78 = sbr.rel (0) target = $region41
    $region40: #{tpu_custom_call.1} parent=1 // pred_region
      %79 = dma.done [#allocation6], 1024
    $region41: #{tpu_custom_call.1} parent=1 // pred_fallthru
      _
    // Predicated region
    $region42: #{tpu_custom_call.1} parent=1 // pred_check
      _
    $region43: #{tpu_custom_call.1} parent=1 // pred_check_branch
      %81 = sbr.rel (0) target = $region45
    $region44: #{tpu_custom_call.1} parent=1 // pred_region
      %82 = dma.done [#allocation9], 1024
    $region45: #{tpu_custom_call.1} parent=1 // pred_fallthru
      _
    %v84 = vld [vmem:[#allocation2] sm:$0xf]
    %v85 = vld [vmem:[#allocation5] sm:$0xf]
    %v86 = vld [vmem:[#allocation5 + $0x4] sm:$0xf]
    %v87 = vld [vmem:[#allocation5 + $0x8] sm:$0xf]
    %v88 = vld [vmem:[#allocation5 + $0xc] sm:$0xf]
    %v89 = vld [vmem:[%s2] sm:$0x1]
    %v91 = vlaneseq
    %v92 = vshrl.u32 %v91, 7
    %v93 = vsub.s32 0, %v92
    %v94 = vrot.slane %v89, %v93
    %v100 = vunpack.c.l.b16 %v85
    %v101 = vunpack.c.l.b16 %v86
    %v102 = vunpack.c.l.b16 %v87
    %v103 = vunpack.c.l.b16 %v88
    %v104 = vpack.c.b16 %v101, %v100
    %v105 = vpack.c.b16 %v103, %v102
    %vm108 = vcmask 261120
    %v110 = vsel %vm108, %v84, 0
    %112 = vmatprep.subr.bf16.mxu0 0
    %113 = vmatpush1.bf16.msra.mxu0 %v104
    %114 = vmatprep.subr.bf16.mxu0 0
    %115 = vmatpush1.bf16.msra.mxu0 %v105
    %116 = vmatprep.subr.bf16.mxu0 0
    %117 = vmatpush1.bf16.msra.mxu0 0
    %118 = vmatprep.subr.bf16.mxu0 0
    %119 = vmatpush1.bf16.msra.mxu0 0
    %120 = vmatprep.subr.bf16.mxu0 0
    %121 = vmatpush1.bf16.msra.mxu0 0
    %122 = vmatprep.subr.bf16.mxu0 0
    %123 = vmatpush1.bf16.msra.mxu0 0
    %124 = vmatprep.subr.bf16.mxu0 0
    %125 = vmatpush1.bf16.msra.mxu0 0
    %126 = vmatprep.subr.bf16.mxu0 0
    %127 = vmatpush1.bf16.msra.mxu0 0
    %128 = vmatprep.subr.bf16.mxu0 0
    %129 = vmatpush1.bf16.msra.mxu0 0
    %130 = vmatprep.subr.bf16.mxu0 0
    %131 = vmatpush1.bf16.msra.mxu0 0
    %132 = vmatprep.subr.bf16.mxu0 0
    %133 = vmatpush1.bf16.msra.mxu0 0
    %134 = vmatprep.subr.bf16.mxu0 0
    %135 = vmatpush1.bf16.msra.mxu0 0
    %136 = vmatprep.subr.bf16.mxu0 0
    %137 = vmatpush1.bf16.msra.mxu0 0
    %138 = vmatprep.subr.bf16.mxu0 0
    %139 = vmatpush1.bf16.msra.mxu0 0
    %140 = vmatprep.subr.bf16.mxu0 0
    %141 = vmatpush1.bf16.msra.mxu0 0
    %142 = vmatprep.subr.bf16.mxu0 0
    %143 = vmatpush1.bf16.msra.mxu0 0
    %144 = vmatprep.mubr.bf16.mxu0 0
    %145 = vmatmul.mubr.bf16.gmra.mrb[0].mxu0 %v110
    %v146 = vpop.f32.mrb[0].mxu0
    %v147 = vadd.f32 %v94, %v146
    %v148 = vpop.f32.mrb[0].mxu0
    %v149 = vpop.f32.mrb[0].mxu0
    %v150 = vpop.f32.mrb[0].mxu0
    %151 = vdwg.mxu0
    %v152 = vmax.f32 %v147, 0.0
    %v153 = vld [vmem:[#allocation7] sm:$0xf]
    %v154 = vld [vmem:[#allocation7 + $0x4] sm:$0xf]
    %v155 = vld [vmem:[#allocation7 + $0x8] sm:$0xf]
    %v156 = vld [vmem:[#allocation7 + $0xc] sm:$0xf]
    %v157 = vld [vmem:[#allocation7 + $0x10] sm:$0xf]
    %v158 = vld [vmem:[#allocation7 + $0x14] sm:$0xf]
    %v159 = vld [vmem:[#allocation7 + $0x18] sm:$0xf]
    %v160 = vld [vmem:[#allocation7 + $0x1c] sm:$0xf]
    %v161 = vld [vmem:[#allocation7 + $0x20] sm:$0xf]
    %v162 = vld [vmem:[#allocation7 + $0x24] sm:$0xf]
    %v163 = vld [vmem:[#allocation7 + $0x28] sm:$0xf]
    %v164 = vld [vmem:[#allocation7 + $0x2c] sm:$0xf]
    %v165 = vld [vmem:[#allocation7 + $0x30] sm:$0xf]
    %v166 = vld [vmem:[#allocation7 + $0x34] sm:$0xf]
    %v167 = vld [vmem:[#allocation7 + $0x38] sm:$0xf]
    %v168 = vld [vmem:[#allocation7 + $0x3c] sm:$0xf]
    %v169 = vld [vmem:[%s4] sm:$0x1]
    %v170 = vpack.c.bf16 %v152, %v152
    %v172 = vlaneseq
    %v173 = vshrl.u32 %v172, 7
    %v174 = vsub.s32 0, %v173
    %v175 = vrot.slane %v169, %v174
    %v193 = vunpack.c.l.b16 %v153
    %v194 = vunpack.c.l.b16 %v154
    %v195 = vunpack.c.l.b16 %v155
    %v196 = vunpack.c.l.b16 %v156
    %v197 = vunpack.c.l.b16 %v157
    %v198 = vunpack.c.l.b16 %v158
    %v199 = vunpack.c.l.b16 %v159
    %v200 = vunpack.c.l.b16 %v160
    %v201 = vunpack.c.l.b16 %v161
    %v202 = vunpack.c.l.b16 %v162
    %v203 = vunpack.c.l.b16 %v163
    %v204 = vunpack.c.l.b16 %v164
    %v205 = vunpack.c.l.b16 %v165
    %v206 = vunpack.c.l.b16 %v166
    %v207 = vunpack.c.l.b16 %v167
    %v208 = vunpack.c.l.b16 %v168
    %v209 = vpack.c.b16 %v194, %v193
    %v210 = vpack.c.b16 %v196, %v195
    %v211 = vpack.c.b16 %v198, %v197
    %v212 = vpack.c.b16 %v200, %v199
    %v213 = vpack.c.b16 %v202, %v201
    %v214 = vpack.c.b16 %v204, %v203
    %v215 = vpack.c.b16 %v206, %v205
    %v216 = vpack.c.b16 %v208, %v207
    %225 = vmatprep.subr.bf16.mxu0 0
    %226 = vmatpush1.bf16.msra.mxu0 %v209
    %227 = vmatprep.subr.bf16.mxu0 0
    %228 = vmatpush1.bf16.msra.mxu0 %v210
    %229 = vmatprep.subr.bf16.mxu0 0
    %230 = vmatpush1.bf16.msra.mxu0 %v211
    %231 = vmatprep.subr.bf16.mxu0 0
    %232 = vmatpush1.bf16.msra.mxu0 %v212
    %233 = vmatprep.subr.bf16.mxu0 0
    %234 = vmatpush1.bf16.msra.mxu0 %v213
    %235 = vmatprep.subr.bf16.mxu0 0
    %236 = vmatpush1.bf16.msra.mxu0 %v214
    %237 = vmatprep.subr.bf16.mxu0 0
    %238 = vmatpush1.bf16.msra.mxu0 %v215
    %239 = vmatprep.subr.bf16.mxu0 0
    %240 = vmatpush1.bf16.msra.mxu0 %v216
    %241 = vmatprep.subr.bf16.mxu0 0
    %242 = vmatpush1.bf16.msra.mxu0 0
    %243 = vmatprep.subr.bf16.mxu0 0
    %244 = vmatpush1.bf16.msra.mxu0 0
    %245 = vmatprep.subr.bf16.mxu0 0
    %246 = vmatpush1.bf16.msra.mxu0 0
    %247 = vmatprep.subr.bf16.mxu0 0
    %248 = vmatpush1.bf16.msra.mxu0 0
    %249 = vmatprep.subr.bf16.mxu0 0
    %250 = vmatpush1.bf16.msra.mxu0 0
    %251 = vmatprep.subr.bf16.mxu0 0
    %252 = vmatpush1.bf16.msra.mxu0 0
    %253 = vmatprep.subr.bf16.mxu0 0
    %254 = vmatpush1.bf16.msra.mxu0 0
    %255 = vmatprep.subr.bf16.mxu0 0
    %256 = vmatpush1.bf16.msra.mxu0 0
    %257 = vmatprep.mubr.bf16.mxu0 0
    %258 = vmatmul.mubr.bf16.gmra.mrb[0].mxu0 %v170
    %v259 = vpop.f32.mrb[0].mxu0
    %v260 = vadd.f32 %v175, %v259
    %v261 = vpop.f32.mrb[0].mxu0
    %v262 = vpop.f32.mrb[0].mxu0
    %v263 = vpop.f32.mrb[0].mxu0
    %264 = vdwg.mxu0
    %v265 = vmax.f32 %v260, 0.0
    %266 = vst [vmem:[#allocation11] sm:$0xff] %v265
    %v267 = vld [vmem:[#allocation8] sm:$0xf]
    %v268 = vld [vmem:[#allocation8 + $0x4] sm:$0xf]
    %v269 = vld [vmem:[#allocation8 + $0x8] sm:$0xf]
    %v270 = vld [vmem:[#allocation8 + $0xc] sm:$0xf]
    %v271 = vld [vmem:[#allocation8 + $0x10] sm:$0xf]
    %v272 = vld [vmem:[#allocation8 + $0x14] sm:$0xf]
    %v273 = vld [vmem:[#allocation8 + $0x18] sm:$0xf]
    %v274 = vld [vmem:[#allocation8 + $0x1c] sm:$0xf]
    %v275 = vld [vmem:[#allocation8 + $0x20] sm:$0xf]
    %v276 = vld [vmem:[#allocation8 + $0x24] sm:$0xf]
    %v277 = vld [vmem:[#allocation8 + $0x28] sm:$0xf]
    %v278 = vld [vmem:[#allocation8 + $0x2c] sm:$0xf]
    %v279 = vld [vmem:[#allocation8 + $0x30] sm:$0xf]
    %v280 = vld [vmem:[#allocation8 + $0x34] sm:$0xf]
    %v281 = vld [vmem:[#allocation8 + $0x38] sm:$0xf]
    %v282 = vld [vmem:[#allocation8 + $0x3c] sm:$0xf]
    %v283 = vpack.c.bf16 %v265, %v265
    %v284 = vld [vmem:[%s6] sm:$0x1]
    %v286 = vlaneseq
    %v287 = vshrl.u32 %v286, 7
    %v288 = vsub.s32 0, %v287
    %v289 = vrot.slane %v284, %v288
    %v307 = vunpack.c.l.b16 %v267
    %v308 = vunpack.c.l.b16 %v268
    %v309 = vunpack.c.l.b16 %v269
    %v310 = vunpack.c.l.b16 %v270
    %v311 = vunpack.c.l.b16 %v271
    %v312 = vunpack.c.l.b16 %v272
    %v313 = vunpack.c.l.b16 %v273
    %v314 = vunpack.c.l.b16 %v274
    %v315 = vunpack.c.l.b16 %v275
    %v316 = vunpack.c.l.b16 %v276
    %v317 = vunpack.c.l.b16 %v277
    %v318 = vunpack.c.l.b16 %v278
    %v319 = vunpack.c.l.b16 %v279
    %v320 = vunpack.c.l.b16 %v280
    %v321 = vunpack.c.l.b16 %v281
    %v322 = vunpack.c.l.b16 %v282
    %v323 = vpack.c.b16 %v308, %v307
    %v324 = vpack.c.b16 %v310, %v309
    %v325 = vpack.c.b16 %v312, %v311
    %v326 = vpack.c.b16 %v314, %v313
    %v327 = vpack.c.b16 %v316, %v315
    %v328 = vpack.c.b16 %v318, %v317
    %v329 = vpack.c.b16 %v320, %v319
    %v330 = vpack.c.b16 %v322, %v321
    %339 = vmatprep.subr.bf16.mxu0 0
    %340 = vmatpush1.bf16.msra.mxu0 %v323
    %341 = vmatprep.subr.bf16.mxu0 0
    %342 = vmatpush1.bf16.msra.mxu0 %v324
    %343 = vmatprep.subr.bf16.mxu0 0
    %344 = vmatpush1.bf16.msra.mxu0 %v325
    %345 = vmatprep.subr.bf16.mxu0 0
    %346 = vmatpush1.bf16.msra.mxu0 %v326
    %347 = vmatprep.subr.bf16.mxu0 0
    %348 = vmatpush1.bf16.msra.mxu0 %v327
    %349 = vmatprep.subr.bf16.mxu0 0
    %350 = vmatpush1.bf16.msra.mxu0 %v328
    %351 = vmatprep.subr.bf16.mxu0 0
    %352 = vmatpush1.bf16.msra.mxu0 %v329
    %353 = vmatprep.subr.bf16.mxu0 0
    %354 = vmatpush1.bf16.msra.mxu0 %v330
    %355 = vmatprep.subr.bf16.mxu0 0
    %356 = vmatpush1.bf16.msra.mxu0 0
    %357 = vmatprep.subr.bf16.mxu0 0
    %358 = vmatpush1.bf16.msra.mxu0 0
    %359 = vmatprep.subr.bf16.mxu0 0
    %360 = vmatpush1.bf16.msra.mxu0 0
    %361 = vmatprep.subr.bf16.mxu0 0
    %362 = vmatpush1.bf16.msra.mxu0 0
    %363 = vmatprep.subr.bf16.mxu0 0
    %364 = vmatpush1.bf16.msra.mxu0 0
    %365 = vmatprep.subr.bf16.mxu0 0
    %366 = vmatpush1.bf16.msra.mxu0 0
    %367 = vmatprep.subr.bf16.mxu0 0
    %368 = vmatpush1.bf16.msra.mxu0 0
    %369 = vmatprep.subr.bf16.mxu0 0
    %370 = vmatpush1.bf16.msra.mxu0 0
    %371 = vmatprep.mubr.bf16.mxu0 0
    %372 = vmatmul.mubr.bf16.gmra.mrb[0].mxu0 %v283
    %v373 = vpop.f32.mrb[0].mxu0
    %v374 = vadd.f32 %v289, %v373
    %v375 = vpop.f32.mrb[0].mxu0
    %v376 = vpop.f32.mrb[0].mxu0
    %v377 = vpop.f32.mrb[0].mxu0
    %378 = vdwg.mxu0
    %379 = vst [vmem:[#allocation10] sm:$0xff] %v374
    // Predicated region
    $region46: #{tpu_custom_call.1} parent=1 // pred_check
      _
    $region47: #{tpu_custom_call.1} parent=1 // pred_check_branch
      %381 = sbr.rel (0) target = $region49
    $region48: #{tpu_custom_call.1} parent=1 // pred_region
      %s383 = ssub.s32 128, 128
      %384 = vsyncadd [#allocation4], %s383
      %s386 = sshll.u32 [#allocation10], 4
      %s387 = int_to_ptr.vmem [resolvable:$true] %s386
      %389 = dma.vmem_to_hbm [thread:$0]  %s387, 128, %s7, [#allocation4]
    $region49: #{tpu_custom_call.1} parent=1 // pred_fallthru
      _
    // Predicated region
    $region50: #{tpu_custom_call.1} parent=1 // pred_check
      _
    $region51: #{tpu_custom_call.1} parent=1 // pred_check_branch
      %391 = sbr.rel (0) target = $region53
    $region52: #{tpu_custom_call.1} parent=1 // pred_region
      %s393 = ssub.s32 128, 128
      %394 = vsyncadd [#allocation12], %s393
      %s396 = sshll.u32 [#allocation11], 4
      %s397 = int_to_ptr.vmem [resolvable:$true] %s396
      %399 = dma.vmem_to_hbm [thread:$0]  %s397, 128, %s8, [#allocation12]
    $region53: #{tpu_custom_call.1} parent=1 // pred_fallthru
      _
    // Predicated region
    $region54: #{tpu_custom_call.1} parent=1 // pred_check
      _
    $region55: #{tpu_custom_call.1} parent=1 // pred_check_branch
      %401 = sbr.rel (0) target = $region57
    $region56: #{tpu_custom_call.1} parent=1 // pred_region
      %402 = dma.done [#allocation4], 128
    $region57: #{tpu_custom_call.1} parent=1 // pred_fallthru
      _
    // Predicated region
    $region58: #{tpu_custom_call.1} parent=1 // pred_check
      _
    $region59: #{tpu_custom_call.1} parent=1 // pred_check_branch
      %404 = sbr.rel (0) target = $region61
    $region60: #{tpu_custom_call.1} parent=1 // pred_region
      %405 = dma.done [#allocation12], 128
    $region61: #{tpu_custom_call.1} parent=1 // pred_fallthru
      _
    %406 = vsyncpa [#allocation3], 1
    %407 = vsyncpa [#allocation6], 1
    %408 = vsyncpa [#allocation9], 1
    %409 = vsyncpa [#allocation4], 1
    %410 = vsyncpa [#allocation12], 1

</llo_original>
